<compile_context>
chip_gen: v5e
topology: v5e:2x2
jax: 0.10.0
libtpu: 0.0.40
codegen_flags: <defaults>
</compile_context>

<pallas_src>
import functools

import numpy as np
import jax
import jax.numpy as jnp
from jax.experimental import pallas as pl
from jax.experimental.pallas import tpu as pltpu

THRESHOLD = 0.05      # self.threshold
GN_GROUPS = 4         # nn.GroupNorm(4, n_chans)
LN_EPS = 1e-5
GN_EPS = 1e-5
LEAKY_SLOPE = 0.01    # nn.LeakyReLU default
LOG2 = float(np.log(2.0))
VMEM_LIMIT = 32 * 1024 * 1024   # safe on v5e/v6e/v7x for these tile sizes


def _dot(a, w_bf16):
    """bf16 MXU matmul with f32 accumulation (activation cast at the call site)."""
    return jnp.dot(a.astype(jnp.bfloat16), w_bf16, preferred_element_type=jnp.float32)


def _layernorm(h, g, b):
    mu = jnp.mean(h, axis=-1, keepdims=True)
    var = jnp.mean((h - mu) ** 2, axis=-1, keepdims=True)
    return (h - mu) * jax.lax.rsqrt(var + LN_EPS) * g + b


def _shift_time(h, direction):
    """Zero-padded time shift (channels-last).  direction=+1 -> y[t]=h[t-1],
    direction=-1 -> y[t]=h[t+1].  Implemented with static slices + concat so it
    lowers cleanly both on hardware and in interpret mode (pltpu.roll rejects
    negative shifts)."""
    # TODO(synk): on hardware, pltpu.roll(shift=1 / shift=T-1) + boundary mask uses
    # the XLU slot and avoids the slice copy; kept portable here.
    zero = jnp.zeros((1, h.shape[1]), h.dtype)
    if direction > 0:
        return jnp.concatenate([zero, h[:-1, :]], axis=0)
    return jnp.concatenate([h[1:, :], zero], axis=0)


# ----------------------------------------------------------------------------
# Kernel 1: input conv stack  (Conv1d k3 -> GroupNorm(4) -> LeakyReLU -> Conv1d k3)
# ----------------------------------------------------------------------------
def _conv3(h, w_ref, b_ref):
    # k=3, stride=1, pad=1 Conv1d over time, channels-last: three shifted matmuls.
    h_prev = _shift_time(h, +1)     # h[t-1], zero pad
    h_next = _shift_time(h, -1)     # h[t+1], zero pad
    y = _dot(h_prev, w_ref[0]) + _dot(h, w_ref[1]) + _dot(h_next, w_ref[2])
    return y + b_ref[...]


def _groupnorm(y, g, b):
    # GroupNorm(G, C): stats over (channels-in-group x T) per batch element.
    T, C = y.shape
    cg = C // GN_GROUPS
    cnt = float(T * cg)
    outs = []
    for gi in range(GN_GROUPS):
        yg = y[:, gi * cg:(gi + 1) * cg]                       # static channel slice
        s = jnp.sum(jnp.sum(yg, axis=1, keepdims=True), axis=0, keepdims=True)
        mu = s / cnt
        d = yg - mu
        v = jnp.sum(jnp.sum(d * d, axis=1, keepdims=True), axis=0, keepdims=True) / cnt
        outs.append(d * jax.lax.rsqrt(v + GN_EPS))
    yn = jnp.concatenate(outs, axis=-1)
    return yn * g + b


def conv_stack_kernel(x_ref, w1_ref, b1_ref, gn_g_ref, gn_b_ref,
                      w2_ref, b2_ref, o_ref):
    x = x_ref[0]                                   # (T, Cin) f32
    y1 = _conv3(x, w1_ref, b1_ref)                 # (T, C)
    yn = _groupnorm(y1, gn_g_ref[...], gn_b_ref[...])
    ya = jnp.where(yn >= 0, yn, LEAKY_SLOPE * yn)  # LeakyReLU
    o_ref[0] = _conv3(ya, w2_ref, b2_ref)


def run_conv_stack(mel, p):
    # TODO(synk): for very large T, add a second (time-tile) grid axis with halo
    # exchange and two-pass GroupNorm stats (needed to fit v7x 64 MiB VMEM).
    B, T, Cin = mel.shape
    C = p["conv1_w"].shape[-1]
    return pl.pallas_call(
        conv_stack_kernel,
        out_shape=jax.ShapeDtypeStruct((B, T, C), jnp.float32),
        grid=(B,),
        in_specs=[
            pl.BlockSpec((1, T, Cin), lambda b: (b, 0, 0)),
            pl.BlockSpec((3, Cin, C), lambda b: (0, 0, 0)),
            pl.BlockSpec((1, C), lambda b: (0, 0)),
            pl.BlockSpec((1, C), lambda b: (0, 0)),
            pl.BlockSpec((1, C), lambda b: (0, 0)),
            pl.BlockSpec((3, C, C), lambda b: (0, 0, 0)),
            pl.BlockSpec((1, C), lambda b: (0, 0)),
        ],
        out_specs=pl.BlockSpec((1, T, C), lambda b: (b, 0, 0)),
        compiler_params=pltpu.CompilerParams(
            dimension_semantics=("parallel",), vmem_limit_bytes=VMEM_LIMIT),
    )(mel, p["conv1_w"], p["conv1_b"], p["gn_g"], p["gn_b"],
      p["conv2_w"], p["conv2_b"])


# ----------------------------------------------------------------------------
# Kernel 2: fused decoder stack (pre-LN MHSA + GELU FFN), grid=(B, L)
#           activation is resident in the output VMEM block across the L axis.
# ----------------------------------------------------------------------------
def decoder_layer_kernel(heads, x_ref,
                         ln1_g, ln1_b, wq_ref, bq_ref, wk_ref, bk_ref,
                         wv_ref, bv_ref, wo_ref, bo_ref, ln2_g, ln2_b,
                         wf1_ref, bf1_ref, wf2_ref, bf2_ref, o_ref):
    l = pl.program_id(1)

    @pl.when(l == 0)
    def _():
        o_ref[0] = x_ref[0]                        # load activation once per batch elem

    x = o_ref[0]                                   # (T, C) f32, VMEM-resident carry
    T, C = x.shape
    dh = C // heads
    scale = 1.0 / float(dh) ** 0.5

    # --- MHSA (pre-LN) ---
    h = _layernorm(x, ln1_g[0], ln1_b[0])
    q = _dot(h, wq_ref[0]) + bq_ref[0]             # full-width (T,C)@(C,C) projections
    k = _dot(h, wk_ref[0]) + bk_ref[0]
    v = _dot(h, wv_ref[0]) + bv_ref[0]

    ctx = []
    for hh in range(heads):                        # per-head only for score/context
        sl = slice(hh * dh, (hh + 1) * dh)
        qh = q[:, sl].astype(jnp.bfloat16)
        khT = k[:, sl].T.astype(jnp.bfloat16)
        vh = v[:, sl].astype(jnp.bfloat16)
        s = jnp.dot(qh, khT, preferred_element_type=jnp.float32) * scale
        s = s - jnp.max(s, axis=-1, keepdims=True)
        p = jnp.exp(s)
        # TODO(synk): pl.reciprocal(..., approx=True) on hardware (EUP slot).
        p = p / jnp.sum(p, axis=-1, keepdims=True)
        ctx.append(jnp.dot(p.astype(jnp.bfloat16), vh,
                           preferred_element_type=jnp.float32))
    ctx = jnp.concatenate(ctx, axis=-1)            # (T, C)

    x1 = x + _dot(ctx, wo_ref[0]) + bo_ref[0]      # single (T,C)@(C,C) out-projection

    # --- FFN (pre-LN, GELU) ---
    h2 = _layernorm(x1, ln2_g[0], ln2_b[0])
    f = _dot(h2, wf1_ref[0]) + bf1_ref[0]
    f = jax.nn.gelu(f)
    f = _dot(f, wf2_ref[0]) + bf2_ref[0]
    o_ref[0] = x1 + f


def run_decoder(x, dp, heads):
    # TODO(synk): for large T, KV-tile the attention (flash-style online softmax)
    # so the (T,T) score matrix never exceeds a VMEM tile on v7x.
    B, T, C = x.shape
    L = dp["wq"].shape[0]
    F = dp["wf1"].shape[-1]

    def w_cc():
        return pl.BlockSpec((1, C, C), lambda b, l: (l, 0, 0))

    def bias_c():
        return pl.BlockSpec((1, 1, C), lambda b, l: (l, 0, 0))

    return pl.pallas_call(
        functools.partial(decoder_layer_kernel, heads),
        out_shape=jax.ShapeDtypeStruct((B, T, C), jnp.float32),
        grid=(B, L),
        in_specs=[
            pl.BlockSpec((1, T, C), lambda b, l: (b, 0, 0)),   # activation (read at l==0)
            bias_c(), bias_c(),                                # ln1 g/b
            w_cc(), bias_c(),                                  # wq, bq
            w_cc(), bias_c(),                                  # wk, bk
            w_cc(), bias_c(),                                  # wv, bv
            w_cc(), bias_c(),                                  # wo, bo
            bias_c(), bias_c(),                                # ln2 g/b
            pl.BlockSpec((1, C, F), lambda b, l: (l, 0, 0)),   # wf1
            pl.BlockSpec((1, 1, F), lambda b, l: (l, 0, 0)),   # bf1
            pl.BlockSpec((1, F, C), lambda b, l: (l, 0, 0)),   # wf2
            bias_c(),                                          # bf2
        ],
        out_specs=pl.BlockSpec((1, T, C), lambda b, l: (b, 0, 0)),
        compiler_params=pltpu.CompilerParams(
            dimension_semantics=("parallel", "arbitrary"),
            vmem_limit_bytes=VMEM_LIMIT),
    )(x, dp["ln1_g"], dp["ln1_b"], dp["wq"], dp["bq"], dp["wk"], dp["bk"],
      dp["wv"], dp["bv"], dp["wo"], dp["bo"], dp["ln2_g"], dp["ln2_b"],
      dp["wf1"], dp["bf1"], dp["wf2"], dp["bf2"])


# ----------------------------------------------------------------------------
# Kernel 3: LayerNorm -> weight_norm Linear -> sigmoid -> cents_decoder(argmax)
#           -> cent_to_f0 -> log(1 + f0/700)          (lane-dense (B,1,T) output)
# ----------------------------------------------------------------------------
def head_kernel(x_ref, ln_g, ln_b, w_ref, b_ref, cent_ref, o_ref):
    x = x_ref[0]                                   # (T, C)
    h = _layernorm(x, ln_g[...], ln_b[...])
    logits = _dot(h, w_ref[...]) + b_ref[...]
    y = jax.nn.sigmoid(logits)                     # (T, out_dims)
    ci = cent_ref[...]                             # (1, out_dims)
    num = jnp.sum(ci * y, axis=-1, keepdims=True)
    den = jnp.sum(y, axis=-1, keepdims=True)
    rtn = num / den                                # (T, 1)
    conf = jnp.max(y, axis=-1, keepdims=True)
    # masked frames -> cent = -inf -> f0 = 0 -> log(1+0/700) = 0 (no 0*inf NaN).
    cent = jnp.where(conf > THRESHOLD, rtn, -jnp.inf)
    f0 = 10.0 * jnp.exp(cent * (LOG2 / 1200.0))    # cent_to_f0: 10 * 2**(cent/1200)
    f0log = jnp.log(1.0 + f0 / 700.0)              # (T, 1); return_hz_f0=False branch
    o_ref[0] = f0log.T                             # lane-dense (1, T) store


def run_head(x, p):
    B, T, C = x.shape
    O = p["dense_w"].shape[1]
    out = pl.pallas_call(
        head_kernel,
        out_shape=jax.ShapeDtypeStruct((B, 1, T), jnp.float32),
        grid=(B,),
        in_specs=[
            pl.BlockSpec((1, T, C), lambda b: (b, 0, 0)),
            pl.BlockSpec((1, C), lambda b: (0, 0)),
            pl.BlockSpec((1, C), lambda b: (0, 0)),
            pl.BlockSpec((C, O), lambda b: (0, 0)),
            pl.BlockSpec((1, O), lambda b: (0, 0)),
            pl.BlockSpec((1, O), lambda b: (0, 0)),
        ],
        out_specs=pl.BlockSpec((1, 1, T), lambda b: (b, 0, 0)),
        compiler_params=pltpu.CompilerParams(
            dimension_semantics=("parallel",), vmem_limit_bytes=VMEM_LIMIT),
    )(x, p["norm_g"], p["norm_b"], p["dense_w"], p["dense_b"], p["cent_table"])
    return jnp.transpose(out, (0, 2, 1))           # (B, T, 1) to match the module API


# ----------------------------------------------------------------------------
# Glue: parameter init + forward
# ----------------------------------------------------------------------------
def init_params(key, in_ch, n_chans, out_dims, n_layers, heads, ffn_mult=2,
                f0_min=32.7, f0_max=1975.5):
    ffn = n_chans * ffn_mult
    L = n_layers
    bf = jnp.bfloat16
    kit = iter(jax.random.split(key, 64))
    nk = lambda: next(kit)

    def nrm(shape, s=0.1, dtype=jnp.float32):
        return (s * jax.random.normal(nk(), shape, dtype=jnp.float32)).astype(dtype)

    p = {
        "conv1_w": nrm((3, in_ch, n_chans), dtype=bf),
        "conv1_b": nrm((1, n_chans)),
        "gn_g": jnp.ones((1, n_chans), jnp.float32),
        "gn_b": jnp.zeros((1, n_chans), jnp.float32),
        "conv2_w": nrm((3, n_chans, n_chans), dtype=bf),
        "conv2_b": nrm((1, n_chans)),
    }
    p["decoder"] = {   # stacked per-layer weights (leading L axis) -- see TODO(synk) above
        "ln1_g": jnp.ones((L, 1, n_chans), jnp.float32),
        "ln1_b": jnp.zeros((L, 1, n_chans), jnp.float32),
        "wq": nrm((L, n_chans, n_chans), dtype=bf), "bq": nrm((L, 1, n_chans)),
        "wk": nrm((L, n_chans, n_chans), dtype=bf), "bk": nrm((L, 1, n_chans)),
        "wv": nrm((L, n_chans, n_chans), dtype=bf), "bv": nrm((L, 1, n_chans)),
        "wo": nrm((L, n_chans, n_chans), dtype=bf), "bo": nrm((L, 1, n_chans)),
        "ln2_g": jnp.ones((L, 1, n_chans), jnp.float32),
        "ln2_b": jnp.zeros((L, 1, n_chans), jnp.float32),
        "wf1": nrm((L, n_chans, ffn), dtype=bf), "bf1": nrm((L, 1, ffn)),
        "wf2": nrm((L, ffn, n_chans), dtype=bf), "bf2": nrm((L, 1, n_chans)),
    }

    # output head: LayerNorm + weight_norm(Linear(n_chans, out_dims))
    p["norm_g"] = jnp.ones((1, n_chans), jnp.float32)
    p["norm_b"] = jnp.zeros((1, n_chans), jnp.float32)
    v = 0.1 * jax.random.normal(nk(), (out_dims, n_chans), dtype=jnp.float32)
    vnorm = jnp.sqrt(jnp.sum(v * v, axis=1, keepdims=True))
    w_eff = (vnorm / vnorm) * v        # weight_norm at init: g = ||v|| (dim=0) -> w == v
    # TODO(synk): if trained weights are loaded, recompute w_eff = (g/||v||)*v with stored g.
    p["dense_w"] = w_eff.T.astype(bf)  # (n_chans, out_dims)
    p["dense_b"] = nrm((1, out_dims))

    cent = np.linspace(1200.0 * np.log2(f0_min / 10.0),
                       1200.0 * np.log2(f0_max / 10.0),
                       out_dims).astype(np.float32)
    p["cent_table"] = jnp.asarray(cent)[None, :]
    return p


def transformer_f0_bce_forward(mel, params, heads):
    """Forward pass of TransformerF0BCE with infer=True, return_hz_f0=False."""
    x = run_conv_stack(mel, params)                # self.stack (use_input_conv=True)
    x = run_decoder(x, params["decoder"], heads)   # self.decoder (fused over layers)
    return run_head(x, params)                     # norm, dense_out, sigmoid, cents_decoder,
                                                   # cent_to_f0, log(1 + f0/700)


if __name__ == "__main__":
    B, T = 2, 8
    IN_CH, N_CHANS, OUT_DIMS = 32, 64, 128
    N_LAYERS, HEADS = 2, 4

    root = jax.random.PRNGKey(0)
    k_param, k_mel = jax.random.split(root)
    params = init_params(k_param, IN_CH, N_CHANS, OUT_DIMS, N_LAYERS, HEADS)
    mel = jax.random.normal(k_mel, (B, T, IN_CH), dtype=jnp.float32)  # B x n_frames x n_unit

    out = transformer_f0_bce_forward(mel, params, HEADS)
    out = jax.block_until_ready(out)
    assert out.shape == (B, T, 1) and out.dtype == jnp.float32
    assert bool(jnp.all(jnp.isfinite(out)))
    print("KERNEL_OK")
</pallas_src>

<mosaic_0001>
module attributes {stable_mosaic.version = 11 : i64} {
  func.func @conv_stack_kernel(%arg0: i32, %arg1: memref<1x8x32xf32, #tpu.memory_space<vmem>>, %arg2: memref<3x32x64xbf16, #tpu.memory_space<vmem>>, %arg3: memref<1x64xf32, #tpu.memory_space<vmem>>, %arg4: memref<1x64xf32, #tpu.memory_space<vmem>>, %arg5: memref<1x64xf32, #tpu.memory_space<vmem>>, %arg6: memref<3x64x64xbf16, #tpu.memory_space<vmem>>, %arg7: memref<1x64xf32, #tpu.memory_space<vmem>>, %arg8: memref<1x8x64xf32, #tpu.memory_space<vmem>>) attributes {dimension_semantics = [#tpu.dimension_semantics<parallel>], iteration_bounds = array<i64: 2>, scalar_prefetch = 0 : i64, scratch_operands = 0 : i64, tpu.core_type = #tpu.core_type<tc>, window_params = [{transform_indices = @transform_0, window_bounds = array<i64: 1, 8, 32>}, {pipeline_mode = #tpu.pipeline_mode<synchronous>, transform_indices = @transform_1, window_bounds = array<i64: 3, 32, 64>}, {pipeline_mode = #tpu.pipeline_mode<synchronous>, transform_indices = @transform_2, window_bounds = array<i64: 1, 64>}, {pipeline_mode = #tpu.pipeline_mode<synchronous>, transform_indices = @transform_3, window_bounds = array<i64: 1, 64>}, {pipeline_mode = #tpu.pipeline_mode<synchronous>, transform_indices = @transform_4, window_bounds = array<i64: 1, 64>}, {pipeline_mode = #tpu.pipeline_mode<synchronous>, transform_indices = @transform_5, window_bounds = array<i64: 3, 64, 64>}, {pipeline_mode = #tpu.pipeline_mode<synchronous>, transform_indices = @transform_6, window_bounds = array<i64: 1, 64>}, {transform_indices = @transform_7, window_bounds = array<i64: 1, 8, 64>}]} {
    %c0 = arith.constant 0 : index
    %c0_0 = arith.constant 0 : index
    %c0_1 = arith.constant 0 : index
    %0 = vector.load %arg1[%c0, %c0_0, %c0_1] : memref<1x8x32xf32, #tpu.memory_space<vmem>>, vector<1x8x32xf32>
    %1 = vector.shape_cast %0 : vector<1x8x32xf32> to vector<8x32xf32>
    %cst = arith.constant 0.000000e+00 : f32
    %2 = vector.broadcast %cst : f32 to vector<1x32xf32>
    %3 = vector.extract_strided_slice %1 {offsets = [0, 0], sizes = [7, 32], strides = [1, 1]} : vector<8x32xf32> to vector<7x32xf32>
    %4 = tpu.concatenate %2, %3 in 0 : vector<1x32xf32>, vector<7x32xf32> -> vector<8x32xf32>
    %cst_2 = arith.constant 0.000000e+00 : f32
    %5 = vector.broadcast %cst_2 : f32 to vector<1x32xf32>
    %6 = vector.extract_strided_slice %1 {offsets = [1, 0], sizes = [7, 32], strides = [1, 1]} : vector<8x32xf32> to vector<7x32xf32>
    %7 = tpu.concatenate %6, %5 in 0 : vector<7x32xf32>, vector<1x32xf32> -> vector<8x32xf32>
    %c0_3 = arith.constant 0 : index
    %c0_4 = arith.constant 0 : index
    %c0_5 = arith.constant 0 : index
    %8 = vector.load %arg2[%c0_3, %c0_4, %c0_5] : memref<3x32x64xbf16, #tpu.memory_space<vmem>>, vector<1x32x64xbf16>
    %9 = vector.shape_cast %8 : vector<1x32x64xbf16> to vector<32x64xbf16>
    %10 = arith.truncf %4 : vector<8x32xf32> to vector<8x32xbf16>
    %cst_6 = arith.constant dense<0.000000e+00> : vector<8x64xf32>
    %11 = tpu.matmul %10, %9, %cst_6 {dimension_numbers = #tpu.dot_dimension_numbers<[1], [0], [0], [1], [0, 0, 1, 1], [], []>} : vector<8x32xbf16>, vector<32x64xbf16>, vector<8x64xf32> -> vector<8x64xf32>
    %c1 = arith.constant 1 : index
    %c0_7 = arith.constant 0 : index
    %c0_8 = arith.constant 0 : index
    %12 = vector.load %arg2[%c1, %c0_7, %c0_8] : memref<3x32x64xbf16, #tpu.memory_space<vmem>>, vector<1x32x64xbf16>
    %13 = vector.shape_cast %12 : vector<1x32x64xbf16> to vector<32x64xbf16>
    %14 = arith.truncf %1 : vector<8x32xf32> to vector<8x32xbf16>
    %cst_9 = arith.constant dense<0.000000e+00> : vector<8x64xf32>
    %15 = tpu.matmul %14, %13, %cst_9 {dimension_numbers = #tpu.dot_dimension_numbers<[1], [0], [0], [1], [0, 0, 1, 1], [], []>} : vector<8x32xbf16>, vector<32x64xbf16>, vector<8x64xf32> -> vector<8x64xf32>
    %16 = arith.addf %11, %15 : vector<8x64xf32>
    %c2 = arith.constant 2 : index
    %c0_10 = arith.constant 0 : index
    %c0_11 = arith.constant 0 : index
    %17 = vector.load %arg2[%c2, %c0_10, %c0_11] : memref<3x32x64xbf16, #tpu.memory_space<vmem>>, vector<1x32x64xbf16>
    %18 = vector.shape_cast %17 : vector<1x32x64xbf16> to vector<32x64xbf16>
    %19 = arith.truncf %7 : vector<8x32xf32> to vector<8x32xbf16>
    %cst_12 = arith.constant dense<0.000000e+00> : vector<8x64xf32>
    %20 = tpu.matmul %19, %18, %cst_12 {dimension_numbers = #tpu.dot_dimension_numbers<[1], [0], [0], [1], [0, 0, 1, 1], [], []>} : vector<8x32xbf16>, vector<32x64xbf16>, vector<8x64xf32> -> vector<8x64xf32>
    %21 = arith.addf %16, %20 : vector<8x64xf32>
    %c0_13 = arith.constant 0 : index
    %c0_14 = arith.constant 0 : index
    %22 = vector.load %arg3[%c0_13, %c0_14] : memref<1x64xf32, #tpu.memory_space<vmem>>, vector<1x64xf32>
    %23 = vector.broadcast %22 : vector<1x64xf32> to vector<8x64xf32>
    %24 = arith.addf %21, %23 : vector<8x64xf32>
    %c0_15 = arith.constant 0 : index
    %c0_16 = arith.constant 0 : index
    %25 = vector.load %arg4[%c0_15, %c0_16] : memref<1x64xf32, #tpu.memory_space<vmem>>, vector<1x64xf32>
    %c0_17 = arith.constant 0 : index
    %c0_18 = arith.constant 0 : index
    %26 = vector.load %arg5[%c0_17, %c0_18] : memref<1x64xf32, #tpu.memory_space<vmem>>, vector<1x64xf32>
    %27 = vector.extract_strided_slice %24 {offsets = [0, 0], sizes = [8, 16], strides = [1, 1]} : vector<8x64xf32> to vector<8x16xf32>
    %cst_19 = arith.constant dense<0.000000e+00> : vector<8xf32>
    %28 = vector.multi_reduction <add>, %27, %cst_19 [1] : vector<8x16xf32> to vector<8xf32>
    %29 = vector.shape_cast %28 : vector<8xf32> to vector<8x1xf32>
    %cst_20 = arith.constant dense<0.000000e+00> : vector<1xf32>
    %30 = vector.multi_reduction <add>, %29, %cst_20 [0] : vector<8x1xf32> to vector<1xf32>
    %31 = vector.shape_cast %30 : vector<1xf32> to vector<1x1xf32>
    %cst_21 = arith.constant 1.280000e+02 : f32
    %32 = vector.broadcast %cst_21 : f32 to vector<1x1xf32>
    %33 = arith.divf %31, %32 : vector<1x1xf32>
    %34 = vector.broadcast %33 : vector<1x1xf32> to vector<8x16xf32>
    %35 = arith.subf %27, %34 : vector<8x16xf32>
    %36 = arith.mulf %35, %35 : vector<8x16xf32>
    %cst_22 = arith.constant dense<0.000000e+00> : vector<8xf32>
    %37 = vector.multi_reduction <add>, %36, %cst_22 [1] : vector<8x16xf32> to vector<8xf32>
    %38 = vector.shape_cast %37 : vector<8xf32> to vector<8x1xf32>
    %cst_23 = arith.constant dense<0.000000e+00> : vector<1xf32>
    %39 = vector.multi_reduction <add>, %38, %cst_23 [0] : vector<8x1xf32> to vector<1xf32>
    %40 = vector.shape_cast %39 : vector<1xf32> to vector<1x1xf32>
    %cst_24 = arith.constant 1.280000e+02 : f32
    %41 = vector.broadcast %cst_24 : f32 to vector<1x1xf32>
    %42 = arith.divf %40, %41 : vector<1x1xf32>
    %cst_25 = arith.constant 9.99999974E-6 : f32
    %43 = vector.broadcast %cst_25 : f32 to vector<1x1xf32>
    %44 = arith.addf %42, %43 : vector<1x1xf32>
    %45 = math.rsqrt %44 : vector<1x1xf32>
    %46 = vector.broadcast %45 : vector<1x1xf32> to vector<8x16xf32>
    %47 = arith.mulf %35, %46 : vector<8x16xf32>
    %48 = vector.extract_strided_slice %24 {offsets = [0, 16], sizes = [8, 16], strides = [1, 1]} : vector<8x64xf32> to vector<8x16xf32>
    %cst_26 = arith.constant dense<0.000000e+00> : vector<8xf32>
    %49 = vector.multi_reduction <add>, %48, %cst_26 [1] : vector<8x16xf32> to vector<8xf32>
    %50 = vector.shape_cast %49 : vector<8xf32> to vector<8x1xf32>
    %cst_27 = arith.constant dense<0.000000e+00> : vector<1xf32>
    %51 = vector.multi_reduction <add>, %50, %cst_27 [0] : vector<8x1xf32> to vector<1xf32>
    %52 = vector.shape_cast %51 : vector<1xf32> to vector<1x1xf32>
    %cst_28 = arith.constant 1.280000e+02 : f32
    %53 = vector.broadcast %cst_28 : f32 to vector<1x1xf32>
    %54 = arith.divf %52, %53 : vector<1x1xf32>
    %55 = vector.broadcast %54 : vector<1x1xf32> to vector<8x16xf32>
    %56 = arith.subf %48, %55 : vector<8x16xf32>
    %57 = arith.mulf %56, %56 : vector<8x16xf32>
    %cst_29 = arith.constant dense<0.000000e+00> : vector<8xf32>
    %58 = vector.multi_reduction <add>, %57, %cst_29 [1] : vector<8x16xf32> to vector<8xf32>
    %59 = vector.shape_cast %58 : vector<8xf32> to vector<8x1xf32>
    %cst_30 = arith.constant dense<0.000000e+00> : vector<1xf32>
    %60 = vector.multi_reduction <add>, %59, %cst_30 [0] : vector<8x1xf32> to vector<1xf32>
    %61 = vector.shape_cast %60 : vector<1xf32> to vector<1x1xf32>
    %cst_31 = arith.constant 1.280000e+02 : f32
    %62 = vector.broadcast %cst_31 : f32 to vector<1x1xf32>
    %63 = arith.divf %61, %62 : vector<1x1xf32>
    %cst_32 = arith.constant 9.99999974E-6 : f32
    %64 = vector.broadcast %cst_32 : f32 to vector<1x1xf32>
    %65 = arith.addf %63, %64 : vector<1x1xf32>
    %66 = math.rsqrt %65 : vector<1x1xf32>
    %67 = vector.broadcast %66 : vector<1x1xf32> to vector<8x16xf32>
    %68 = arith.mulf %56, %67 : vector<8x16xf32>
    %69 = vector.extract_strided_slice %24 {offsets = [0, 32], sizes = [8, 16], strides = [1, 1]} : vector<8x64xf32> to vector<8x16xf32>
    %cst_33 = arith.constant dense<0.000000e+00> : vector<8xf32>
    %70 = vector.multi_reduction <add>, %69, %cst_33 [1] : vector<8x16xf32> to vector<8xf32>
    %71 = vector.shape_cast %70 : vector<8xf32> to vector<8x1xf32>
    %cst_34 = arith.constant dense<0.000000e+00> : vector<1xf32>
    %72 = vector.multi_reduction <add>, %71, %cst_34 [0] : vector<8x1xf32> to vector<1xf32>
    %73 = vector.shape_cast %72 : vector<1xf32> to vector<1x1xf32>
    %cst_35 = arith.constant 1.280000e+02 : f32
    %74 = vector.broadcast %cst_35 : f32 to vector<1x1xf32>
    %75 = arith.divf %73, %74 : vector<1x1xf32>
    %76 = vector.broadcast %75 : vector<1x1xf32> to vector<8x16xf32>
    %77 = arith.subf %69, %76 : vector<8x16xf32>
    %78 = arith.mulf %77, %77 : vector<8x16xf32>
    %cst_36 = arith.constant dense<0.000000e+00> : vector<8xf32>
    %79 = vector.multi_reduction <add>, %78, %cst_36 [1] : vector<8x16xf32> to vector<8xf32>
    %80 = vector.shape_cast %79 : vector<8xf32> to vector<8x1xf32>
    %cst_37 = arith.constant dense<0.000000e+00> : vector<1xf32>
    %81 = vector.multi_reduction <add>, %80, %cst_37 [0] : vector<8x1xf32> to vector<1xf32>
    %82 = vector.shape_cast %81 : vector<1xf32> to vector<1x1xf32>
    %cst_38 = arith.constant 1.280000e+02 : f32
    %83 = vector.broadcast %cst_38 : f32 to vector<1x1xf32>
    %84 = arith.divf %82, %83 : vector<1x1xf32>
    %cst_39 = arith.constant 9.99999974E-6 : f32
    %85 = vector.broadcast %cst_39 : f32 to vector<1x1xf32>
    %86 = arith.addf %84, %85 : vector<1x1xf32>
    %87 = math.rsqrt %86 : vector<1x1xf32>
    %88 = vector.broadcast %87 : vector<1x1xf32> to vector<8x16xf32>
    %89 = arith.mulf %77, %88 : vector<8x16xf32>
    %90 = vector.extract_strided_slice %24 {offsets = [0, 48], sizes = [8, 16], strides = [1, 1]} : vector<8x64xf32> to vector<8x16xf32>
    %cst_40 = arith.constant dense<0.000000e+00> : vector<8xf32>
    %91 = vector.multi_reduction <add>, %90, %cst_40 [1] : vector<8x16xf32> to vector<8xf32>
    %92 = vector.shape_cast %91 : vector<8xf32> to vector<8x1xf32>
    %cst_41 = arith.constant dense<0.000000e+00> : vector<1xf32>
    %93 = vector.multi_reduction <add>, %92, %cst_41 [0] : vector<8x1xf32> to vector<1xf32>
    %94 = vector.shape_cast %93 : vector<1xf32> to vector<1x1xf32>
    %cst_42 = arith.constant 1.280000e+02 : f32
    %95 = vector.broadcast %cst_42 : f32 to vector<1x1xf32>
    %96 = arith.divf %94, %95 : vector<1x1xf32>
    %97 = vector.broadcast %96 : vector<1x1xf32> to vector<8x16xf32>
    %98 = arith.subf %90, %97 : vector<8x16xf32>
    %99 = arith.mulf %98, %98 : vector<8x16xf32>
    %cst_43 = arith.constant dense<0.000000e+00> : vector<8xf32>
    %100 = vector.multi_reduction <add>, %99, %cst_43 [1] : vector<8x16xf32> to vector<8xf32>
    %101 = vector.shape_cast %100 : vector<8xf32> to vector<8x1xf32>
    %cst_44 = arith.constant dense<0.000000e+00> : vector<1xf32>
    %102 = vector.multi_reduction <add>, %101, %cst_44 [0] : vector<8x1xf32> to vector<1xf32>
    %103 = vector.shape_cast %102 : vector<1xf32> to vector<1x1xf32>
    %cst_45 = arith.constant 1.280000e+02 : f32
    %104 = vector.broadcast %cst_45 : f32 to vector<1x1xf32>
    %105 = arith.divf %103, %104 : vector<1x1xf32>
    %cst_46 = arith.constant 9.99999974E-6 : f32
    %106 = vector.broadcast %cst_46 : f32 to vector<1x1xf32>
    %107 = arith.addf %105, %106 : vector<1x1xf32>
    %108 = math.rsqrt %107 : vector<1x1xf32>
    %109 = vector.broadcast %108 : vector<1x1xf32> to vector<8x16xf32>
    %110 = arith.mulf %98, %109 : vector<8x16xf32>
    %111 = tpu.concatenate %47, %68, %89, %110 in 1 : vector<8x16xf32>, vector<8x16xf32>, vector<8x16xf32>, vector<8x16xf32> -> vector<8x64xf32>
    %112 = vector.broadcast %25 : vector<1x64xf32> to vector<8x64xf32>
    %113 = arith.mulf %111, %112 : vector<8x64xf32>
    %114 = vector.broadcast %26 : vector<1x64xf32> to vector<8x64xf32>
    %115 = arith.addf %113, %114 : vector<8x64xf32>
    %cst_47 = arith.constant 0.000000e+00 : f32
    %116 = vector.broadcast %cst_47 : f32 to vector<8x64xf32>
    %117 = arith.cmpf oge, %115, %116 : vector<8x64xf32>
    %cst_48 = arith.constant 0.00999999977 : f32
    %118 = vector.broadcast %cst_48 : f32 to vector<8x64xf32>
    %119 = arith.mulf %118, %115 : vector<8x64xf32>
    %120 = arith.select %117, %115, %119 : vector<8x64xi1>, vector<8x64xf32>
    %cst_49 = arith.constant 0.000000e+00 : f32
    %121 = vector.broadcast %cst_49 : f32 to vector<1x64xf32>
    %122 = vector.extract_strided_slice %120 {offsets = [0, 0], sizes = [7, 64], strides = [1, 1]} : vector<8x64xf32> to vector<7x64xf32>
    %123 = tpu.concatenate %121, %122 in 0 : vector<1x64xf32>, vector<7x64xf32> -> vector<8x64xf32>
    %cst_50 = arith.constant 0.000000e+00 : f32
    %124 = vector.broadcast %cst_50 : f32 to vector<1x64xf32>
    %125 = vector.extract_strided_slice %120 {offsets = [1, 0], sizes = [7, 64], strides = [1, 1]} : vector<8x64xf32> to vector<7x64xf32>
    %126 = tpu.concatenate %125, %124 in 0 : vector<7x64xf32>, vector<1x64xf32> -> vector<8x64xf32>
    %c0_51 = arith.constant 0 : index
    %c0_52 = arith.constant 0 : index
    %c0_53 = arith.constant 0 : index
    %127 = vector.load %arg6[%c0_51, %c0_52, %c0_53] : memref<3x64x64xbf16, #tpu.memory_space<vmem>>, vector<1x64x64xbf16>
    %128 = vector.shape_cast %127 : vector<1x64x64xbf16> to vector<64x64xbf16>
    %129 = arith.truncf %123 : vector<8x64xf32> to vector<8x64xbf16>
    %cst_54 = arith.constant dense<0.000000e+00> : vector<8x64xf32>
    %130 = tpu.matmul %129, %128, %cst_54 {dimension_numbers = #tpu.dot_dimension_numbers<[1], [0], [0], [1], [0, 0, 1, 1], [], []>} : vector<8x64xbf16>, vector<64x64xbf16>, vector<8x64xf32> -> vector<8x64xf32>
    %c1_55 = arith.constant 1 : index
    %c0_56 = arith.constant 0 : index
    %c0_57 = arith.constant 0 : index
    %131 = vector.load %arg6[%c1_55, %c0_56, %c0_57] : memref<3x64x64xbf16, #tpu.memory_space<vmem>>, vector<1x64x64xbf16>
    %132 = vector.shape_cast %131 : vector<1x64x64xbf16> to vector<64x64xbf16>
    %133 = arith.truncf %120 : vector<8x64xf32> to vector<8x64xbf16>
    %cst_58 = arith.constant dense<0.000000e+00> : vector<8x64xf32>
    %134 = tpu.matmul %133, %132, %cst_58 {dimension_numbers = #tpu.dot_dimension_numbers<[1], [0], [0], [1], [0, 0, 1, 1], [], []>} : vector<8x64xbf16>, vector<64x64xbf16>, vector<8x64xf32> -> vector<8x64xf32>
    %135 = arith.addf %130, %134 : vector<8x64xf32>
    %c2_59 = arith.constant 2 : index
    %c0_60 = arith.constant 0 : index
    %c0_61 = arith.constant 0 : index
    %136 = vector.load %arg6[%c2_59, %c0_60, %c0_61] : memref<3x64x64xbf16, #tpu.memory_space<vmem>>, vector<1x64x64xbf16>
    %137 = vector.shape_cast %136 : vector<1x64x64xbf16> to vector<64x64xbf16>
    %138 = arith.truncf %126 : vector<8x64xf32> to vector<8x64xbf16>
    %cst_62 = arith.constant dense<0.000000e+00> : vector<8x64xf32>
    %139 = tpu.matmul %138, %137, %cst_62 {dimension_numbers = #tpu.dot_dimension_numbers<[1], [0], [0], [1], [0, 0, 1, 1], [], []>} : vector<8x64xbf16>, vector<64x64xbf16>, vector<8x64xf32> -> vector<8x64xf32>
    %140 = arith.addf %135, %139 : vector<8x64xf32>
    %c0_63 = arith.constant 0 : index
    %c0_64 = arith.constant 0 : index
    %141 = vector.load %arg7[%c0_63, %c0_64] : memref<1x64xf32, #tpu.memory_space<vmem>>, vector<1x64xf32>
    %142 = vector.broadcast %141 : vector<1x64xf32> to vector<8x64xf32>
    %143 = arith.addf %140, %142 : vector<8x64xf32>
    %c0_65 = arith.constant 0 : index
    %c0_66 = arith.constant 0 : index
    %c0_67 = arith.constant 0 : index
    %144 = vector.load %arg8[%c0_65, %c0_66, %c0_67] : memref<1x8x64xf32, #tpu.memory_space<vmem>>, vector<1x8x64xf32>
    %145 = vector.shape_cast %144 : vector<1x8x64xf32> to vector<8x64xf32>
    %146 = vector.shape_cast %143 : vector<8x64xf32> to vector<1x8x64xf32>
    tpu.vector_store %arg8[%c0_65, %c0_66, %c0_67], %146 {strides = array<i32>} : memref<1x8x64xf32, #tpu.memory_space<vmem>>, vector<1x8x64xf32>,
    return
  }
  func.func @transform_0(%arg0: i32) -> (i32, i32, i32) {
    %c0_i32 = arith.constant 0 : i32
    %c0_i32_0 = arith.constant 0 : i32
    %c0_i32_1 = arith.constant 0 : i32
    return %arg0, %c0_i32, %c0_i32_0 : i32, i32, i32
  }
  func.func @transform_1(%arg0: i32) -> (i32, i32, i32) {
    %c0_i32 = arith.constant 0 : i32
    %c0_i32_0 = arith.constant 0 : i32
    %c0_i32_1 = arith.constant 0 : i32
    %c0_i32_2 = arith.constant 0 : i32
    return %c0_i32, %c0_i32_0, %c0_i32_1 : i32, i32, i32
  }
  func.func @transform_2(%arg0: i32) -> (i32, i32) {
    %c0_i32 = arith.constant 0 : i32
    %c0_i32_0 = arith.constant 0 : i32
    %c0_i32_1 = arith.constant 0 : i32
    return %c0_i32, %c0_i32_0 : i32, i32
  }
  func.func @transform_3(%arg0: i32) -> (i32, i32) {
    %c0_i32 = arith.constant 0 : i32
    %c0_i32_0 = arith.constant 0 : i32
    %c0_i32_1 = arith.constant 0 : i32
    return %c0_i32, %c0_i32_0 : i32, i32
  }
  func.func @transform_4(%arg0: i32) -> (i32, i32) {
    %c0_i32 = arith.constant 0 : i32
    %c0_i32_0 = arith.constant 0 : i32
    %c0_i32_1 = arith.constant 0 : i32
    return %c0_i32, %c0_i32_0 : i32, i32
  }
  func.func @transform_5(%arg0: i32) -> (i32, i32, i32) {
    %c0_i32 = arith.constant 0 : i32
    %c0_i32_0 = arith.constant 0 : i32
    %c0_i32_1 = arith.constant 0 : i32
    %c0_i32_2 = arith.constant 0 : i32
    return %c0_i32, %c0_i32_0, %c0_i32_1 : i32, i32, i32
  }
  func.func @transform_6(%arg0: i32) -> (i32, i32) {
    %c0_i32 = arith.constant 0 : i32
    %c0_i32_0 = arith.constant 0 : i32
    %c0_i32_1 = arith.constant 0 : i32
    return %c0_i32, %c0_i32_0 : i32, i32
  }
  func.func @transform_7(%arg0: i32) -> (i32, i32, i32) {
    %c0_i32 = arith.constant 0 : i32
    %c0_i32_0 = arith.constant 0 : i32
    %c0_i32_1 = arith.constant 0 : i32
    return %arg0, %c0_i32, %c0_i32_0 : i32, i32, i32
  }
}

</mosaic_0001>

<llo_original>
// kernel: tpu_custom_call.1
$region0: #{tpu_custom_call.1}
  #allocation0 [shape = 'u32[]', space=smem, size = 0x4, offset = 0x4, fixed_abs, tag = 'smem constant byte address 0x4 - core index']
  #allocation1 [shape = 'u32[72,128]{1,0:T(1,128)}', space=vmem, size = 0x9000, scoped, tag = 'internal scratch']
  %s0 = inlined_call_operand.hbm [shape: f32[2,8,32], index: 0, kind: input, shape index: {}]
  %s1 = inlined_call_operand.hbm [shape: bf16[3,32,64], index: 1, kind: input, shape index: {}]
  %s2 = inlined_call_operand.vmem [shape: f32[1,64], index: 2, kind: input, shape index: {}]
  %s3 = inlined_call_operand.vmem [shape: f32[1,64], index: 3, kind: input, shape index: {}]
  %s4 = inlined_call_operand.vmem [shape: f32[1,64], index: 4, kind: input, shape index: {}]
  %s5 = inlined_call_operand.hbm [shape: bf16[3,64,64], index: 5, kind: input, shape index: {}]
  %s6 = inlined_call_operand.vmem [shape: f32[1,64], index: 6, kind: input, shape index: {}]
  %s7 = inlined_call_operand.hbm [shape: f32[2,8,64], index: 7, kind: output, shape index: {}]
  %s8 = sld [smem:[#allocation0]]
  $region73: #{tpu_custom_call.1} parent=0
    _
  %s10 = ssub.s32 1, %s8
  %s11 = scalar_select 0, %s10, %s8
  $region1: #{tpu_custom_call.1} parent=0
    #allocation2 [shape = 'u8[8192]{0}', space=vmem, size = 0x2000, scoped, tag = 'input window, operand 0']
    #allocation3 [shape = 's32[2]{0}', space=sflag, size = 0x8, scoped, tag = 'scoped memory for tpu_custom_call.1']
    #allocation4 [shape = 's32[2]{0}', space=sflag, size = 0x8, scoped, tag = 'scoped memory for tpu_custom_call.1']
    #allocation5 [shape = 'u8[24576]{0}', space=vmem, size = 0x6000, scoped, tag = 'input window, operand 1, single buffered']
    #allocation6 [shape = 's32[1]{0}', space=sflag, size = 0x4, scoped, tag = 'scoped memory for tpu_custom_call.1']
    #allocation7 [shape = 'u8[49152]{0}', space=vmem, size = 0xc000, scoped, tag = 'input window, operand 5, single buffered']
    #allocation8 [shape = 'u8[8192]{0}', space=vmem, size = 0x2000, scoped, tag = 'output window, operand 0']
    %12 = vsyncpa [#allocation3], 0
    %s13 = scalar_lea.sflag [#allocation3], 1
    %14 = vsyncpa %s13, 0
    %15 = vsyncpa [#allocation6], 0
    %16 = vsyncpa [#allocation4], 0
    %s17 = scalar_lea.sflag [#allocation4], 1
    %18 = vsyncpa %s17, 0
    loop: start=0, step=1, limit=4
    $region2: #{tpu_custom_call.1} parent=1 // loop_pre_header
      _
    $region3: #{tpu_custom_call.1} parent=1 // loop_header
      %s20 = sphi 0, %s24
      %p21 = scmp.ge.s32.totalorder %s20, 4
      %s30 = sphi 0, %s32
      %s33 = sphi 0, %s30
      %s34 = sphi 0, %s33
      %s50 = sphi 0, %s34
      %s54 = sphi 0, %s54
      %s56 = sphi 0, %s54
      %s57 = sphi 0, %s56
      %s71 = sphi 0, %s57
      %s75 = sphi 0, %s75
      %s77 = sphi 0, %s75
      %s78 = sphi 0, %s77
      %s92 = sphi 0, %s78
      %s96 = sphi 0, %s96
      %s98 = sphi 0, %s96
      %s99 = sphi 0, %s98
      %s113 = sphi 0, %s99
      %s117 = sphi 0, %s117
      %s119 = sphi 0, %s117
      %s120 = sphi 0, %s119
      %s134 = sphi 0, %s120
      %s138 = sphi 0, %s138
      %s140 = sphi 0, %s138
      %s141 = sphi 0, %s140
      %s155 = sphi 0, %s141
      %s159 = sphi 0, %s159
      %s161 = sphi 0, %s159
      %s162 = sphi 0, %s161
      %s176 = sphi 0, %s162
      %s182 = sphi 0, %s184
      %s185 = sphi 0, %s182
      %s186 = sphi 0, %s185
      %s202 = sphi 0, %s186
    $region4: #{tpu_custom_call.1} parent=1 // loop_header_branch
      %23 = sbr.rel (%p21) target = $region8
    $region5: #{tpu_custom_call.1} parent=1 // loop_body
      %s25 = ssub.s32 %s20, 1
      %s26 = ssub.s32 %s20, 2
      %s27 = sadd.s32 %s20, 1
      %s28 = ssub.s32 %s20, %s27
      %p29 = scmp.eq.s32.totalorder %s28, 0
      %s31 = sadd.s32 %s30, 1
      %s32 = scalar_select %p29, %s30, %s31
      %p35 = pneg %p29
      %p36 = scmp.eq.s32.totalorder %s20, 1
      %p37 = por %p35, %p36
      %p38 = scmp.ne.s32.totalorder %s30, %s33
      %p39 = scmp.eq.s32.totalorder %s20, 0
      %p40 = por %p38, %p39
      %p41 = scmp.ne.s32.totalorder %s30, %s33
      %p42 = scmp.eq.s32.totalorder %s25, 1
      %p43 = por %p41, %p42
      %p44 = scmp.ne.s32.totalorder %s33, %s34
      %p45 = scmp.eq.s32.totalorder %s25, 0
      %p46 = por %p44, %p45
      %p47 = scmp.ne.s32.totalorder %s33, %s34
      %p48 = scmp.eq.s32.totalorder %s26, 1
      %p49 = por %p47, %p48
      %p51 = scmp.ne.s32.totalorder %s34, %s50
      %p52 = scmp.eq.s32.totalorder %s26, 0
      %p53 = por %p51, %p52
      %s55 = sadd.s32 %s54, 1
      %p58 = scmp.eq.s32.totalorder %s20, 1
      %p59 = scmp.ne.s32.totalorder %s54, %s56
      %p60 = scmp.eq.s32.totalorder %s20, 0
      %p61 = por %p59, %p60
      %p62 = scmp.ne.s32.totalorder %s54, %s56
      %p63 = scmp.eq.s32.totalorder %s25, 1
      %p64 = por %p62, %p63
      %p65 = scmp.ne.s32.totalorder %s56, %s57
      %p66 = scmp.eq.s32.totalorder %s25, 0
      %p67 = por %p65, %p66
      %p68 = scmp.ne.s32.totalorder %s56, %s57
      %p69 = scmp.eq.s32.totalorder %s26, 1
      %p70 = por %p68, %p69
      %p72 = scmp.ne.s32.totalorder %s57, %s71
      %p73 = scmp.eq.s32.totalorder %s26, 0
      %p74 = por %p72, %p73
      %s76 = sadd.s32 %s75, 1
      %p79 = scmp.eq.s32.totalorder %s20, 1
      %p80 = scmp.ne.s32.totalorder %s75, %s77
      %p81 = scmp.eq.s32.totalorder %s20, 0
      %p82 = por %p80, %p81
      %p83 = scmp.ne.s32.totalorder %s75, %s77
      %p84 = scmp.eq.s32.totalorder %s25, 1
      %p85 = por %p83, %p84
      %p86 = scmp.ne.s32.totalorder %s77, %s78
      %p87 = scmp.eq.s32.totalorder %s25, 0
      %p88 = por %p86, %p87
      %p89 = scmp.ne.s32.totalorder %s77, %s78
      %p90 = scmp.eq.s32.totalorder %s26, 1
      %p91 = por %p89, %p90
      %p93 = scmp.ne.s32.totalorder %s78, %s92
      %p94 = scmp.eq.s32.totalorder %s26, 0
      %p95 = por %p93, %p94
      %s97 = sadd.s32 %s96, 1
      %p100 = scmp.eq.s32.totalorder %s20, 1
      %p101 = scmp.ne.s32.totalorder %s96, %s98
      %p102 = scmp.eq.s32.totalorder %s20, 0
      %p103 = por %p101, %p102
      %p104 = scmp.ne.s32.totalorder %s96, %s98
      %p105 = scmp.eq.s32.totalorder %s25, 1
      %p106 = por %p104, %p105
      %p107 = scmp.ne.s32.totalorder %s98, %s99
      %p108 = scmp.eq.s32.totalorder %s25, 0
      %p109 = por %p107, %p108
      %p110 = scmp.ne.s32.totalorder %s98, %s99
      %p111 = scmp.eq.s32.totalorder %s26, 1
      %p112 = por %p110, %p111
      %p114 = scmp.ne.s32.totalorder %s99, %s113
      %p115 = scmp.eq.s32.totalorder %s26, 0
      %p116 = por %p114, %p115
      %s118 = sadd.s32 %s117, 1
      %p121 = scmp.eq.s32.totalorder %s20, 1
      %p122 = scmp.ne.s32.totalorder %s117, %s119
      %p123 = scmp.eq.s32.totalorder %s20, 0
      %p124 = por %p122, %p123
      %p125 = scmp.ne.s32.totalorder %s117, %s119
      %p126 = scmp.eq.s32.totalorder %s25, 1
      %p127 = por %p125, %p126
      %p128 = scmp.ne.s32.totalorder %s119, %s120
      %p129 = scmp.eq.s32.totalorder %s25, 0
      %p130 = por %p128, %p129
      %p131 = scmp.ne.s32.totalorder %s119, %s120
      %p132 = scmp.eq.s32.totalorder %s26, 1
      %p133 = por %p131, %p132
      %p135 = scmp.ne.s32.totalorder %s120, %s134
      %p136 = scmp.eq.s32.totalorder %s26, 0
      %p137 = por %p135, %p136
      %s139 = sadd.s32 %s138, 1
      %p142 = scmp.eq.s32.totalorder %s20, 1
      %p143 = scmp.ne.s32.totalorder %s138, %s140
      %p144 = scmp.eq.s32.totalorder %s20, 0
      %p145 = por %p143, %p144
      %p146 = scmp.ne.s32.totalorder %s138, %s140
      %p147 = scmp.eq.s32.totalorder %s25, 1
      %p148 = por %p146, %p147
      %p149 = scmp.ne.s32.totalorder %s140, %s141
      %p150 = scmp.eq.s32.totalorder %s25, 0
      %p151 = por %p149, %p150
      %p152 = scmp.ne.s32.totalorder %s140, %s141
      %p153 = scmp.eq.s32.totalorder %s26, 1
      %p154 = por %p152, %p153
      %p156 = scmp.ne.s32.totalorder %s141, %s155
      %p157 = scmp.eq.s32.totalorder %s26, 0
      %p158 = por %p156, %p157
      %s160 = sadd.s32 %s159, 1
      %p163 = scmp.eq.s32.totalorder %s20, 1
      %p164 = scmp.ne.s32.totalorder %s159, %s161
      %p165 = scmp.eq.s32.totalorder %s20, 0
      %p166 = por %p164, %p165
      %p167 = scmp.ne.s32.totalorder %s159, %s161
      %p168 = scmp.eq.s32.totalorder %s25, 1
      %p169 = por %p167, %p168
      %p170 = scmp.ne.s32.totalorder %s161, %s162
      %p171 = scmp.eq.s32.totalorder %s25, 0
      %p172 = por %p170, %p171
      %p173 = scmp.ne.s32.totalorder %s161, %s162
      %p174 = scmp.eq.s32.totalorder %s26, 1
      %p175 = por %p173, %p174
      %p177 = scmp.ne.s32.totalorder %s162, %s176
      %p178 = scmp.eq.s32.totalorder %s26, 0
      %p179 = por %p177, %p178
      %s180 = ssub.s32 %s20, %s27
      %p181 = scmp.eq.s32.totalorder %s180, 0
      %s183 = sadd.s32 %s182, 1
      %s184 = scalar_select %p181, %s182, %s183
      %p187 = pneg %p181
      %p188 = scmp.eq.s32.totalorder %s20, 1
      %p189 = por %p187, %p188
      %p190 = scmp.ne.s32.totalorder %s182, %s185
      %p191 = scmp.eq.s32.totalorder %s20, 0
      %p192 = por %p190, %p191
      %p193 = scmp.ne.s32.totalorder %s182, %s185
      %p194 = scmp.eq.s32.totalorder %s25, 1
      %p195 = por %p193, %p194
      %p196 = scmp.ne.s32.totalorder %s185, %s186
      %p197 = scmp.eq.s32.totalorder %s25, 0
      %p198 = por %p196, %p197
      %p199 = scmp.ne.s32.totalorder %s185, %s186
      %p200 = scmp.eq.s32.totalorder %s26, 1
      %p201 = por %p199, %p200
      %p203 = scmp.ne.s32.totalorder %s186, %s202
      %p204 = scmp.eq.s32.totalorder %s26, 0
      %p205 = por %p203, %p204
      %p206 = scmp.le.s32.totalorder 1, %s20
      %p207 = scmp.lt.s32.totalorder %s20, 3
      %p208 = pnand %p206, %p207
      %p209 = pneg %p208
      // Predicated region
      $region9: #{tpu_custom_call.1} parent=5 // pred_check
        _
      $region10: #{tpu_custom_call.1} parent=5 // pred_check_branch
        %211 = sbr.rel (%p208) target = $region12
      $region11: #{tpu_custom_call.1} parent=5 // pred_region
        %s212 = ssub.s32 %s20, 1
        // Predicated region
        $region13: #{tpu_custom_call.1} parent=11 // pred_check
          %p213 = pneg %p67
        $region14: #{tpu_custom_call.1} parent=11 // pred_check_branch
          %215 = sbr.rel (%p213) target = $region16
        $region15: #{tpu_custom_call.1} parent=11 // pred_region
          %217 = vsyncadd [#allocation6], 0
          %s218 = sshll.u32 %s1, 4
          %s219 = int_to_ptr.hbm [resolvable:$true] %s218
          %s220 = sshll.u32 [#allocation5], 4
          %s221 = int_to_ptr.vmem [resolvable:$true] %s220
          %226 = dma.hbm_to_vmem [thread:$0]  %s219, 768, %s221, [#allocation6], 64, 64, 4
        $region16: #{tpu_custom_call.1} parent=11 // pred_fallthru
          _
        // Predicated region
        $region17: #{tpu_custom_call.1} parent=11 // pred_check
          %p227 = pneg %p88
        $region18: #{tpu_custom_call.1} parent=11 // pred_check_branch
          %229 = sbr.rel (%p227) target = $region20
        $region19: #{tpu_custom_call.1} parent=11 // pred_region
          _
        $region20: #{tpu_custom_call.1} parent=11 // pred_fallthru
          _
        // Predicated region
        $region21: #{tpu_custom_call.1} parent=11 // pred_check
          %p230 = pneg %p109
        $region22: #{tpu_custom_call.1} parent=11 // pred_check_branch
          %232 = sbr.rel (%p230) target = $region24
        $region23: #{tpu_custom_call.1} parent=11 // pred_region
          _
        $region24: #{tpu_custom_call.1} parent=11 // pred_fallthru
          _
        // Predicated region
        $region25: #{tpu_custom_call.1} parent=11 // pred_check
          %p233 = pneg %p130
        $region26: #{tpu_custom_call.1} parent=11 // pred_check_branch
          %235 = sbr.rel (%p233) target = $region28
        $region27: #{tpu_custom_call.1} parent=11 // pred_region
          _
        $region28: #{tpu_custom_call.1} parent=11 // pred_fallthru
          _
        // Predicated region
        $region29: #{tpu_custom_call.1} parent=11 // pred_check
          %p236 = pneg %p151
        $region30: #{tpu_custom_call.1} parent=11 // pred_check_branch
          %238 = sbr.rel (%p236) target = $region32
        $region31: #{tpu_custom_call.1} parent=11 // pred_region
          %240 = vsyncadd [#allocation6], 0
          %s241 = sshll.u32 %s5, 4
          %s242 = int_to_ptr.hbm [resolvable:$true] %s241
          %s243 = sshll.u32 [#allocation7], 4
          %s244 = int_to_ptr.vmem [resolvable:$true] %s243
          %249 = dma.hbm_to_vmem [thread:$0]  %s242, 1536, %s244, [#allocation6], 64, 64, 4
        $region32: #{tpu_custom_call.1} parent=11 // pred_fallthru
          _
        // Predicated region
        $region33: #{tpu_custom_call.1} parent=11 // pred_check
          %p250 = pneg %p172
        $region34: #{tpu_custom_call.1} parent=11 // pred_check_branch
          %252 = sbr.rel (%p250) target = $region36
        $region35: #{tpu_custom_call.1} parent=11 // pred_region
          _
        $region36: #{tpu_custom_call.1} parent=11 // pred_fallthru
          _
      $region12: #{tpu_custom_call.1} parent=5 // pred_fallthru
        _
      %p253 = scmp.lt.s32.totalorder %s20, 2
      // Predicated region
      $region37: #{tpu_custom_call.1} parent=5 // pred_check
        %p254 = pneg %p253
      $region38: #{tpu_custom_call.1} parent=5 // pred_check_branch
        %256 = sbr.rel (%p254) target = $region40
      $region39: #{tpu_custom_call.1} parent=5 // pred_region
        // Predicated region
        $region41: #{tpu_custom_call.1} parent=39 // pred_check
          %p257 = pneg %p40
        $region42: #{tpu_custom_call.1} parent=39 // pred_check_branch
          %259 = sbr.rel (%p257) target = $region44
        $region43: #{tpu_custom_call.1} parent=39 // pred_region
          %s260 = sand.u32 %s30, 1
          %s261 = scalar_lea.sflag [#allocation3], %s260
          %s262 = sand.u32 %s30, 1
          %s263 = smul.addr %s262, 8
          %s264 = scalar_lea.vmem [#allocation2], %s263
          %266 = vsyncadd %s261, 0
          %s267 = smul.addr %s20, 8
          %s268 = scalar_lea.hbm %s0, %s267
          %s270 = sshll.u32 %s268, 4
          %s271 = int_to_ptr.hbm [resolvable:$true] %s270
          %s272 = sshll.u32 %s264, 4
          %s273 = int_to_ptr.vmem [resolvable:$true] %s272
          %275 = dma.hbm_to_vmem [thread:$0]  %s271, 128, %s273, %s261
        $region44: #{tpu_custom_call.1} parent=39 // pred_fallthru
          _
      $region40: #{tpu_custom_call.1} parent=5 // pred_fallthru
        _
      %p276 = scmp.le.s32.totalorder 1, %s20
      %p277 = scmp.lt.s32.totalorder %s20, 3
      %p278 = pnand %p276, %p277
      %p279 = pneg %p278
      // Predicated region
      $region45: #{tpu_custom_call.1} parent=5 // pred_check
        _
      $region46: #{tpu_custom_call.1} parent=5 // pred_check_branch
        %281 = sbr.rel (%p278) target = $region48
      $region47: #{tpu_custom_call.1} parent=5 // pred_region
        %s282 = ssub.s32 %s20, 1
        %s283 = sand.u32 %s33, 1
        %s284 = scalar_lea.sflag [#allocation3], %s283
        %s285 = sand.u32 %s33, 1
        %s286 = smul.addr %s285, 8
        %s287 = scalar_lea.vmem [#allocation2], %s286
        // Predicated region
        $region49: #{tpu_custom_call.1} parent=47 // pred_check
          %p288 = pneg %p46
        $region50: #{tpu_custom_call.1} parent=47 // pred_check_branch
          %290 = sbr.rel (%p288) target = $region52
        $region51: #{tpu_custom_call.1} parent=47 // pred_region
          %292 = dma.done %s284, 128
        $region52: #{tpu_custom_call.1} parent=47 // pred_fallthru
          _
        // Predicated region
        $region53: #{tpu_custom_call.1} parent=47 // pred_check
          %p293 = pneg %p67
        $region54: #{tpu_custom_call.1} parent=47 // pred_check_branch
          %295 = sbr.rel (%p293) target = $region56
        $region55: #{tpu_custom_call.1} parent=47 // pred_region
          %297 = dma.done [#allocation6], 768
        $region56: #{tpu_custom_call.1} parent=47 // pred_fallthru
          _
        // Predicated region
        $region57: #{tpu_custom_call.1} parent=47 // pred_check
          %p298 = pneg %p151
        $region58: #{tpu_custom_call.1} parent=47 // pred_check_branch
          %300 = sbr.rel (%p298) target = $region60
        $region59: #{tpu_custom_call.1} parent=47 // pred_region
          %302 = dma.done [#allocation6], 1536
        $region60: #{tpu_custom_call.1} parent=47 // pred_fallthru
          _
        %s303 = sand.u32 %s33, 1
        %s304 = scalar_lea.sflag [#allocation3], %s303
        %s305 = sand.u32 %s33, 1
        %s306 = smul.addr %s305, 8
        %s307 = scalar_lea.vmem [#allocation2], %s306
        %p308 = pneg %p46
        %p309 = pneg %p43
        %p310 = pneg %p67
        %p311 = pneg %p64
        %p312 = pneg %p88
        %p313 = pneg %p85
        %p314 = pneg %p109
        %p315 = pneg %p106
        %p316 = pneg %p130
        %p317 = pneg %p127
        %p318 = pneg %p151
        %p319 = pneg %p148
        %p320 = pneg %p172
        %p321 = pneg %p169
        %p322 = pneg %p198
        %p323 = pneg %p195
        %s324 = sand.u32 %s185, 1
        %s325 = scalar_lea.sflag [#allocation4], %s324
        %s326 = sand.u32 %s185, 1
        %s327 = smul.addr %s326, 8
        %s328 = scalar_lea.vmem [#allocation8], %s327
        %v330 = vld [vmem:[%s287] sm:$0xff]
        %v332 = vrot.slane %v330, 7
        %vm334 = vcmask 1040384
        %v335 = vsel %vm334, 0.0, %v332
        %v336 = vrot.slane %v330, 1
        %vm338 = vcmask 1046528
        %v339 = vsel %vm338, %v336, 0.0
        %v340 = vld [vmem:[#allocation5] sm:$0xf]
        %v341 = vld [vmem:[#allocation5 + $0x4] sm:$0xf]
        %v342 = vld [vmem:[#allocation5 + $0x8] sm:$0xf]
        %v343 = vld [vmem:[#allocation5 + $0xc] sm:$0xf]
        %v344 = vpack.c.bf16 %v335, %v335
        %s345 = scalar_lea.vmem [#allocation5], 16
        %v346 = vld [vmem:[%s345] sm:$0xf]
        %v347 = vld [vmem:[%s345 + $0x4] sm:$0xf]
        %v348 = vld [vmem:[%s345 + $0x8] sm:$0xf]
        %v349 = vld [vmem:[%s345 + $0xc] sm:$0xf]
        %v350 = vpack.c.bf16 %v330, %v330
        %v355 = vunpack.c.l.b16 %v346
        %v356 = vunpack.c.l.b16 %v347
        %v357 = vunpack.c.l.b16 %v348
        %v358 = vunpack.c.l.b16 %v349
        %v359 = vpack.c.b16 %v356, %v355
        %v360 = vpack.c.b16 %v358, %v357
        %vm363 = vcmask 261120
        %v365 = vsel %vm363, %v350, 0
        %367 = vmatpush.bf16.msra.mxu0 0
        %368 = vmatpush.bf16.msra.mxu0 0
        %369 = vmatpush.bf16.msra.mxu0 0
        %370 = vmatpush.bf16.msra.mxu0 0
        %371 = vmatpush.bf16.msra.mxu0 0
        %372 = vmatpush.bf16.msra.mxu0 0
        %373 = vmatpush.bf16.msra.mxu0 %v360
        %374 = vmatpush.bf16.msra.mxu0 %v359
        %375 = vmatmul.bf16.gmra.mxu0 %v365
        %v376 = vpop.f32.mrf.mxu0
        %v377 = vadd.f32 0.0, %v376
        %v378 = vpop.f32.mrf.mxu0
        %379 = vdwg.mxu0
        %v384 = vunpack.c.l.b16 %v340
        %v385 = vunpack.c.l.b16 %v341
        %v386 = vunpack.c.l.b16 %v342
        %v387 = vunpack.c.l.b16 %v343
        %v388 = vpack.c.b16 %v385, %v384
        %v389 = vpack.c.b16 %v387, %v386
        %v393 = vsel %vm363, %v344, 0
        %395 = vmatpush.bf16.msra.mxu0 0
        %396 = vmatpush.bf16.msra.mxu0 0
        %397 = vmatpush.bf16.msra.mxu0 0
        %398 = vmatpush.bf16.msra.mxu0 0
        %399 = vmatpush.bf16.msra.mxu0 0
        %400 = vmatpush.bf16.msra.mxu0 0
        %401 = vmatpush.bf16.msra.mxu0 %v389
        %402 = vmatpush.bf16.msra.mxu0 %v388
        %403 = vmatmul.bf16.gmra.mxu0 %v393
        %v404 = vpop.f32.mrf.mxu0
        %v405 = vadd.f32 %v377, %v404
        %v406 = vpop.f32.mrf.mxu0
        %407 = vdwg.mxu0
        %s408 = scalar_lea.vmem [#allocation5], 32
        %v409 = vld [vmem:[%s408] sm:$0xf]
        %v410 = vld [vmem:[%s408 + $0x4] sm:$0xf]
        %v411 = vld [vmem:[%s408 + $0x8] sm:$0xf]
        %v412 = vld [vmem:[%s408 + $0xc] sm:$0xf]
        %v413 = vpack.c.bf16 %v339, %v339
        %v418 = vunpack.c.l.b16 %v409
        %v419 = vunpack.c.l.b16 %v410
        %v420 = vunpack.c.l.b16 %v411
        %v421 = vunpack.c.l.b16 %v412
        %v422 = vpack.c.b16 %v419, %v418
        %v423 = vpack.c.b16 %v421, %v420
        %v427 = vsel %vm363, %v413, 0
        %429 = vmatpush.bf16.msra.mxu0 0
        %430 = vmatpush.bf16.msra.mxu0 0
        %431 = vmatpush.bf16.msra.mxu0 0
        %432 = vmatpush.bf16.msra.mxu0 0
        %433 = vmatpush.bf16.msra.mxu0 0
        %434 = vmatpush.bf16.msra.mxu0 0
        %435 = vmatpush.bf16.msra.mxu0 %v423
        %436 = vmatpush.bf16.msra.mxu0 %v422
        %437 = vmatmul.bf16.gmra.mxu0 %v427
        %v438 = vpop.f32.mrf.mxu0
        %v439 = vadd.f32 0.0, %v438
        %v440 = vpop.f32.mrf.mxu0
        %441 = vdwg.mxu0
        %v442 = vadd.f32 %v405, %v439
        %v443 = vld [vmem:[%s2] sm:$0x1]
        %v445 = vperm.slane %v443, 0
        %v447 = vadd.f32 %v442, %v445
        %v448 = vld [vmem:[%s3] sm:$0x1]
        %v449 = vld [vmem:[%s4] sm:$0x1]
        %vm450 = vcmask 130048
        %v451 = vsel %vm450, %v447, 0.0
        %452 = vadd.xlane.f32.xlu0 %v451
        %v453 = vpop.xlane.xlu0 %452
        %v454 = vrot.slane %v453, 4
        %v455 = vadd.f32 %v453, %v454
        %v456 = vrot.slane %v455, 2
        %v457 = vadd.f32 %v455, %v456
        %v458 = vrot.slane %v457, 1
        %v459 = vadd.f32 %v457, %v458
        %v460 = vrcp.pop 128.0
        %v461 = vmul.f32 128.0, %v460
        %v462 = vsub.f32 1.0, %v461
        %v463 = vmul.f32 %v460, %v462
        %v464 = vadd.f32 %v460, %v463
        %vm465 = vweird.f32 %v460
        %v466 = vsel %vm465, %v460, %v464
        %v467 = vmul.f32 %v459, %v466
        %v468 = vsub.f32 %v447, %v467
        %v469 = vmul.f32 %v468, %v468
        %v470 = vsel %vm450, %v469, 0.0
        %471 = vadd.xlane.f32.xlu0 %v470
        %v472 = vpop.xlane.xlu0 %471
        %v473 = vrot.slane %v472, 4
        %v474 = vadd.f32 %v472, %v473
        %v475 = vrot.slane %v474, 2
        %v476 = vadd.f32 %v474, %v475
        %v477 = vrot.slane %v476, 1
        %v478 = vadd.f32 %v476, %v477
        %v479 = vmul.f32 %v478, %v466
        %v480 = vadd.f32 %v479, 1e-05
        %v481 = vrsqrt.pop %v480
        %v482 = vmul.f32 %v481, %v480
        %v483 = vmul.f32 %v482, %v481
        %v484 = vmul.f32 0.5, %v483
        %v485 = vsub.f32 1.5, %v484
        %v486 = vmul.f32 %v481, %v485
        %vm487 = vweird.f32 %v480
        %vm488 = vweird.f32 %v481
        %vm489 = vmor %vm487, %vm488
        %v490 = vsel %vm489, %v481, %v486
        %v491 = vmul.f32 %v468, %v490
        %493 = vrot.lane.b32.xlu0 %v447, 112
        %v494 = vpop.permute.xlu0 %493
        %v496 = vsel %vm450, %v494, 0.0
        %497 = vadd.xlane.f32.xlu0 %v496
        %v498 = vpop.xlane.xlu0 %497
        %v499 = vrot.slane %v498, 4
        %v500 = vadd.f32 %v498, %v499
        %v501 = vrot.slane %v500, 2
        %v502 = vadd.f32 %v500, %v501
        %v503 = vrot.slane %v502, 1
        %v504 = vadd.f32 %v502, %v503
        %v505 = vmul.f32 %v504, %v466
        %v506 = vsub.f32 %v447, %v505
        %v507 = vmul.f32 %v506, %v506
        %509 = vrot.lane.b32.xlu0 %v507, 112
        %v510 = vpop.permute.xlu0 %509
        %v512 = vsel %vm450, %v510, 0.0
        %513 = vadd.xlane.f32.xlu0 %v512
        %v514 = vpop.xlane.xlu0 %513
        %v515 = vrot.slane %v514, 4
        %v516 = vadd.f32 %v514, %v515
        %v517 = vrot.slane %v516, 2
        %v518 = vadd.f32 %v516, %v517
        %v519 = vrot.slane %v518, 1
        %v520 = vadd.f32 %v518, %v519
        %v521 = vmul.f32 %v520, %v466
        %v522 = vadd.f32 %v521, 1e-05
        %v523 = vrsqrt.pop %v522
        %v524 = vmul.f32 %v523, %v522
        %v525 = vmul.f32 %v524, %v523
        %v526 = vmul.f32 0.5, %v525
        %v527 = vsub.f32 1.5, %v526
        %v528 = vmul.f32 %v523, %v527
        %vm529 = vweird.f32 %v522
        %vm530 = vweird.f32 %v523
        %vm531 = vmor %vm529, %vm530
        %v532 = vsel %vm531, %v523, %v528
        %v533 = vmul.f32 %v506, %v532
        %534 = vrot.lane.b32.xlu0 %v447, 96
        %v535 = vpop.permute.xlu0 %534
        %v537 = vsel %vm450, %v535, 0.0
        %538 = vadd.xlane.f32.xlu0 %v537
        %v539 = vpop.xlane.xlu0 %538
        %v540 = vrot.slane %v539, 4
        %v541 = vadd.f32 %v539, %v540
        %v542 = vrot.slane %v541, 2
        %v543 = vadd.f32 %v541, %v542
        %v544 = vrot.slane %v543, 1
        %v545 = vadd.f32 %v543, %v544
        %v546 = vmul.f32 %v545, %v466
        %v547 = vsub.f32 %v447, %v546
        %v548 = vmul.f32 %v547, %v547
        %550 = vrot.lane.b32.xlu0 %v548, 96
        %v551 = vpop.permute.xlu0 %550
        %v553 = vsel %vm450, %v551, 0.0
        %554 = vadd.xlane.f32.xlu0 %v553
        %v555 = vpop.xlane.xlu0 %554
        %v556 = vrot.slane %v555, 4
        %v557 = vadd.f32 %v555, %v556
        %v558 = vrot.slane %v557, 2
        %v559 = vadd.f32 %v557, %v558
        %v560 = vrot.slane %v559, 1
        %v561 = vadd.f32 %v559, %v560
        %v562 = vmul.f32 %v561, %v466
        %v563 = vadd.f32 %v562, 1e-05
        %v564 = vrsqrt.pop %v563
        %v565 = vmul.f32 %v564, %v563
        %v566 = vmul.f32 %v565, %v564
        %v567 = vmul.f32 0.5, %v566
        %v568 = vsub.f32 1.5, %v567
        %v569 = vmul.f32 %v564, %v568
        %vm570 = vweird.f32 %v563
        %vm571 = vweird.f32 %v564
        %vm572 = vmor %vm570, %vm571
        %v573 = vsel %vm572, %v564, %v569
        %v574 = vmul.f32 %v547, %v573
        %575 = vrot.lane.b32.xlu0 %v447, 80
        %v576 = vpop.permute.xlu0 %575
        %v578 = vsel %vm450, %v576, 0.0
        %579 = vadd.xlane.f32.xlu0 %v578
        %v580 = vpop.xlane.xlu0 %579
        %v581 = vrot.slane %v580, 4
        %v582 = vadd.f32 %v580, %v581
        %v583 = vrot.slane %v582, 2
        %v584 = vadd.f32 %v582, %v583
        %v585 = vrot.slane %v584, 1
        %v586 = vadd.f32 %v584, %v585
        %v587 = vmul.f32 %v586, %v466
        %v588 = vsub.f32 %v447, %v587
        %v589 = vmul.f32 %v588, %v588
        %591 = vrot.lane.b32.xlu0 %v589, 80
        %v592 = vpop.permute.xlu0 %591
        %v594 = vsel %vm450, %v592, 0.0
        %595 = vadd.xlane.f32.xlu0 %v594
        %v596 = vpop.xlane.xlu0 %595
        %v597 = vrot.slane %v596, 4
        %v598 = vadd.f32 %v596, %v597
        %v599 = vrot.slane %v598, 2
        %v600 = vadd.f32 %v598, %v599
        %v601 = vrot.slane %v600, 1
        %v602 = vadd.f32 %v600, %v601
        %v603 = vmul.f32 %v602, %v466
        %v604 = vadd.f32 %v603, 1e-05
        %v605 = vrsqrt.pop %v604
        %v606 = vmul.f32 %v605, %v604
        %v607 = vmul.f32 %v606, %v605
        %v608 = vmul.f32 0.5, %v607
        %v609 = vsub.f32 1.5, %v608
        %v610 = vmul.f32 %v605, %v609
        %vm611 = vweird.f32 %v604
        %vm612 = vweird.f32 %v605
        %vm613 = vmor %vm611, %vm612
        %v614 = vsel %vm613, %v605, %v610
        %v615 = vmul.f32 %v588, %v614
        %v616 = vsel %vm450, %v491, %v533
        %v617 = vsel %vm363, %v616, %v574
        %vm618 = vcmask 392192
        %v619 = vsel %vm618, %v617, %v615
        %v621 = vperm.slane %v448, 0
        %v623 = vmul.f32 %v619, %v621
        %v625 = vperm.slane %v449, 0
        %v627 = vadd.f32 %v623, %v625
        %vm628 = vcmp.ge.f32.partialorder %v627, 0.0
        %v629 = vmul.f32 %v627, 0.01
        %v630 = vsel %vm628, %v627, %v629
        %v632 = vrot.slane %v630, 7
        %v634 = vsel %vm334, 0.0, %v632
        %v635 = vrot.slane %v630, 1
        %v637 = vsel %vm338, %v635, 0.0
        %v638 = vld [vmem:[#allocation7] sm:$0xf]
        %v639 = vld [vmem:[#allocation7 + $0x4] sm:$0xf]
        %v640 = vld [vmem:[#allocation7 + $0x8] sm:$0xf]
        %v641 = vld [vmem:[#allocation7 + $0xc] sm:$0xf]
        %v642 = vld [vmem:[#allocation7 + $0x10] sm:$0xf]
        %v643 = vld [vmem:[#allocation7 + $0x14] sm:$0xf]
        %v644 = vld [vmem:[#allocation7 + $0x18] sm:$0xf]
        %v645 = vld [vmem:[#allocation7 + $0x1c] sm:$0xf]
        %v646 = vpack.c.bf16 %v634, %v634
        %s647 = scalar_lea.vmem [#allocation7], 32
        %v648 = vld [vmem:[%s647] sm:$0xf]
        %v649 = vld [vmem:[%s647 + $0x4] sm:$0xf]
        %v650 = vld [vmem:[%s647 + $0x8] sm:$0xf]
        %v651 = vld [vmem:[%s647 + $0xc] sm:$0xf]
        %v652 = vld [vmem:[%s647 + $0x10] sm:$0xf]
        %v653 = vld [vmem:[%s647 + $0x14] sm:$0xf]
        %v654 = vld [vmem:[%s647 + $0x18] sm:$0xf]
        %v655 = vld [vmem:[%s647 + $0x1c] sm:$0xf]
        %v656 = vpack.c.bf16 %v630, %v630
        %v665 = vunpack.c.l.b16 %v648
        %v666 = vunpack.c.l.b16 %v649
        %v667 = vunpack.c.l.b16 %v650
        %v668 = vunpack.c.l.b16 %v651
        %v669 = vunpack.c.l.b16 %v652
        %v670 = vunpack.c.l.b16 %v653
        %v671 = vunpack.c.l.b16 %v654
        %v672 = vunpack.c.l.b16 %v655
        %v673 = vpack.c.b16 %v666, %v665
        %v674 = vpack.c.b16 %v668, %v667
        %v675 = vpack.c.b16 %v670, %v669
        %v676 = vpack.c.b16 %v672, %v671
        %vm681 = vcmask 523264
        %v683 = vsel %vm681, %v656, 0
        %685 = vmatpush.bf16.msra.mxu0 0
        %686 = vmatpush.bf16.msra.mxu0 0
        %687 = vmatpush.bf16.msra.mxu0 0
        %688 = vmatpush.bf16.msra.mxu0 0
        %689 = vmatpush.bf16.msra.mxu0 %v676
        %690 = vmatpush.bf16.msra.mxu0 %v675
        %691 = vmatpush.bf16.msra.mxu0 %v674
        %692 = vmatpush.bf16.msra.mxu0 %v673
        %693 = vmatmul.bf16.gmra.mxu0 %v683
        %v694 = vpop.f32.mrf.mxu0
        %v695 = vadd.f32 0.0, %v694
        %v696 = vpop.f32.mrf.mxu0
        %697 = vdwg.mxu0
        %v706 = vunpack.c.l.b16 %v638
        %v707 = vunpack.c.l.b16 %v639
        %v708 = vunpack.c.l.b16 %v640
        %v709 = vunpack.c.l.b16 %v641
        %v710 = vunpack.c.l.b16 %v642
        %v711 = vunpack.c.l.b16 %v643
        %v712 = vunpack.c.l.b16 %v644
        %v713 = vunpack.c.l.b16 %v645
        %v714 = vpack.c.b16 %v707, %v706
        %v715 = vpack.c.b16 %v709, %v708
        %v716 = vpack.c.b16 %v711, %v710
        %v717 = vpack.c.b16 %v713, %v712
        %v723 = vsel %vm681, %v646, 0
        %725 = vmatpush.bf16.msra.mxu0 0
        %726 = vmatpush.bf16.msra.mxu0 0
        %727 = vmatpush.bf16.msra.mxu0 0
        %728 = vmatpush.bf16.msra.mxu0 0
        %729 = vmatpush.bf16.msra.mxu0 %v717
        %730 = vmatpush.bf16.msra.mxu0 %v716
        %731 = vmatpush.bf16.msra.mxu0 %v715
        %732 = vmatpush.bf16.msra.mxu0 %v714
        %733 = vmatmul.bf16.gmra.mxu0 %v723
        %v734 = vpop.f32.mrf.mxu0
        %v735 = vadd.f32 %v695, %v734
        %v736 = vpop.f32.mrf.mxu0
        %737 = vdwg.mxu0
        %s738 = scalar_lea.vmem [#allocation7], 64
        %v739 = vld [vmem:[%s738] sm:$0xf]
        %v740 = vld [vmem:[%s738 + $0x4] sm:$0xf]
        %v741 = vld [vmem:[%s738 + $0x8] sm:$0xf]
        %v742 = vld [vmem:[%s738 + $0xc] sm:$0xf]
        %v743 = vld [vmem:[%s738 + $0x10] sm:$0xf]
        %v744 = vld [vmem:[%s738 + $0x14] sm:$0xf]
        %v745 = vld [vmem:[%s738 + $0x18] sm:$0xf]
        %v746 = vld [vmem:[%s738 + $0x1c] sm:$0xf]
        %v747 = vpack.c.bf16 %v637, %v637
        %v756 = vunpack.c.l.b16 %v739
        %v757 = vunpack.c.l.b16 %v740
        %v758 = vunpack.c.l.b16 %v741
        %v759 = vunpack.c.l.b16 %v742
        %v760 = vunpack.c.l.b16 %v743
        %v761 = vunpack.c.l.b16 %v744
        %v762 = vunpack.c.l.b16 %v745
        %v763 = vunpack.c.l.b16 %v746
        %v764 = vpack.c.b16 %v757, %v756
        %v765 = vpack.c.b16 %v759, %v758
        %v766 = vpack.c.b16 %v761, %v760
        %v767 = vpack.c.b16 %v763, %v762
        %v773 = vsel %vm681, %v747, 0
        %775 = vmatpush.bf16.msra.mxu0 0
        %776 = vmatpush.bf16.msra.mxu0 0
        %777 = vmatpush.bf16.msra.mxu0 0
        %778 = vmatpush.bf16.msra.mxu0 0
        %779 = vmatpush.bf16.msra.mxu0 %v767
        %780 = vmatpush.bf16.msra.mxu0 %v766
        %781 = vmatpush.bf16.msra.mxu0 %v765
        %782 = vmatpush.bf16.msra.mxu0 %v764
        %783 = vmatmul.bf16.gmra.mxu0 %v773
        %v784 = vpop.f32.mrf.mxu0
        %v785 = vadd.f32 0.0, %v784
        %v786 = vpop.f32.mrf.mxu0
        %787 = vdwg.mxu0
        %v788 = vadd.f32 %v735, %v785
        %v789 = vld [vmem:[%s6] sm:$0x1]
        %v791 = vperm.slane %v789, 0
        %v793 = vadd.f32 %v788, %v791
        %794 = vst.msk [vmem:[%s328] sm:$0xff] %vm681, %v793
        %s795 = sand.u32 %s185, 1
        %s796 = scalar_lea.sflag [#allocation4], %s795
        %s797 = sand.u32 %s185, 1
        %s798 = smul.addr %s797, 8
        %s799 = scalar_lea.vmem [#allocation8], %s798
        // Predicated region
        $region61: #{tpu_custom_call.1} parent=47 // pred_check
          %p800 = pneg %p195
        $region62: #{tpu_custom_call.1} parent=47 // pred_check_branch
          %802 = sbr.rel (%p800) target = $region64
        $region63: #{tpu_custom_call.1} parent=47 // pred_region
          %804 = vsyncadd %s796, 0
          %s805 = smul.addr %s25, 8
          %s806 = scalar_lea.hbm %s7, %s805
          %s808 = sshll.u32 %s799, 4
          %s809 = int_to_ptr.vmem [resolvable:$true] %s808
          %s810 = sshll.u32 %s806, 4
          %s811 = int_to_ptr.hbm [resolvable:$true] %s810
          %813 = dma.vmem_to_hbm [thread:$0]  %s809, 128, %s811, %s796
        $region64: #{tpu_custom_call.1} parent=47 // pred_fallthru
          _
      $region48: #{tpu_custom_call.1} parent=5 // pred_fallthru
        _
      %p814 = scmp.le.s32.totalorder 2, %s20
      // Predicated region
      $region65: #{tpu_custom_call.1} parent=5 // pred_check
        %p815 = pneg %p814
      $region66: #{tpu_custom_call.1} parent=5 // pred_check_branch
        %817 = sbr.rel (%p815) target = $region68
      $region67: #{tpu_custom_call.1} parent=5 // pred_region
        %s818 = ssub.s32 %s20, 2
        // Predicated region
        $region69: #{tpu_custom_call.1} parent=67 // pred_check
          %p819 = pneg %p201
        $region70: #{tpu_custom_call.1} parent=67 // pred_check_branch
          %821 = sbr.rel (%p819) target = $region72
        $region71: #{tpu_custom_call.1} parent=67 // pred_region
          %s822 = sand.u32 %s186, 1
          %s823 = scalar_lea.sflag [#allocation4], %s822
          %s824 = sand.u32 %s186, 1
          %s825 = smul.addr %s824, 8
          %s826 = scalar_lea.vmem [#allocation8], %s825
          %828 = dma.done %s823, 128
        $region72: #{tpu_custom_call.1} parent=67 // pred_fallthru
          _
      $region68: #{tpu_custom_call.1} parent=5 // pred_fallthru
        _
    $region6: #{tpu_custom_call.1} parent=1 // loop_footer
      %s24 = sadd.s32 1, %s20
    $region7: #{tpu_custom_call.1} parent=1 // loop_footer_branch
      %19 = sbr.rel target = $region3
    $region8: #{tpu_custom_call.1} parent=1 // loop_exit
      _
    %829 = vsyncpa [#allocation3], 1
    %s830 = scalar_lea.sflag [#allocation3], 1
    %831 = vsyncpa %s830, 1
    %832 = vsyncpa [#allocation6], 1
    %833 = vsyncpa [#allocation4], 1
    %s834 = scalar_lea.sflag [#allocation4], 1
    %835 = vsyncpa %s834, 1

</llo_original>
